<compile_context>
chip_gen: v7x
topology: tpu7x:2x2x1
jax: 0.10.0
libtpu: 0.0.40
codegen_flags: <defaults>
</compile_context>

<pallas_src>
import functools

import jax
import jax.numpy as jnp
import numpy as np
from jax.experimental import pallas as pl
from jax.experimental.pallas import tpu as pltpu


def se_kernel(x_ref, w1_ref, w2_ref, o_ref, *, inv_hw):
    x = x_ref[0]                                    # (c, hw_pad): channels on sublanes
    hw_pad = x.shape[-1]

    # ---- squeeze: spatial mean as a single MXU pass (padded columns are zero) ----
    pool_vec = jnp.full((hw_pad, 1), inv_hw, dtype=jnp.float32)
    pooled = jnp.dot(x, pool_vec, preferred_element_type=jnp.float32)        # (c, 1)

    # ---- excitation MLP, PyTorch (out, in) weight layout, channels stay on sublanes ----
    h = jnp.dot(w1_ref[...], pooled, preferred_element_type=jnp.float32)     # (hidden, 1)
    h = h * jax.nn.sigmoid(h)                                                # SiLU
    g = jax.nn.sigmoid(
        jnp.dot(w2_ref[...], h, preferred_element_type=jnp.float32))         # (c, 1)

    # ---- scale: lane-broadcast of the per-channel gate column ----
    o_ref[0] = (x * g).astype(o_ref.dtype)


def squeeze_excitation(x, w1, w2):
    """x: (b, c, h, w). w1: (hidden, c), w2: (c, hidden) — PyTorch nn.Linear (out, in) layout."""
    b, c, hgt, wid = x.shape
    hw = hgt * wid
    hidden = w1.shape[0]

    # Lane-dense spatial axis: pad hw up to a multiple of 128 (no-op when hw % 128 == 0).
    hw_pad = ((hw + 127) // 128) * 128
    x2 = x.reshape(b, c, hw)
    if hw_pad != hw:
        x2 = jnp.pad(x2, ((0, 0), (0, 0), (0, hw_pad - hw)))

    kernel = functools.partial(se_kernel, inv_hw=1.0 / hw)

    # VMEM budget: double-buffered x block + double-buffered out block + weights + slack.
    block_bytes = c * hw_pad * x2.dtype.itemsize
    weight_bytes = (w1.size + w2.size) * w1.dtype.itemsize
    vmem_needed = 4 * block_bytes + 2 * weight_bytes + (1 << 20)
    vmem_limit = int(min(max(vmem_needed, 8 << 20), 64 << 20))   # cap below v7x physical

    flops = b * (2 * c * hw_pad + 4 * hidden * c + 3 * c * hw_pad)
    bytes_accessed = 2 * b * block_bytes + weight_bytes

    out = pl.pallas_call(
        kernel,
        out_shape=jax.ShapeDtypeStruct((b, c, hw_pad), x.dtype),
        grid_spec=pltpu.PrefetchScalarGridSpec(
            num_scalar_prefetch=0,
            grid=(b,),                                               # one sample per step
            in_specs=[
                pl.BlockSpec((1, c, hw_pad), lambda i: (i, 0, 0)),   # x block (per sample)
                pl.BlockSpec((hidden, c), lambda i: (0, 0)),         # W1 (out, in), resident
                pl.BlockSpec((c, hidden), lambda i: (0, 0)),         # W2 (out, in), resident
            ],
            out_specs=pl.BlockSpec((1, c, hw_pad), lambda i: (i, 0, 0)),
        ),
        compiler_params=pltpu.CompilerParams(
            dimension_semantics=("parallel",),
            vmem_limit_bytes=vmem_limit),
        input_output_aliases={0: 0},   # output reuses x2's HBM buffer when donated
        cost_estimate=pl.CostEstimate(
            flops=flops,
            transcendentals=b * (hidden + c),
            bytes_accessed=bytes_accessed),
    )(x2, w1, w2)

    if hw_pad != hw:
        out = out[:, :, :hw]
    return out.reshape(b, c, hgt, wid)


def reference(x, w1, w2):
    # pure-JAX reference mirroring the PyTorch forward (F.linear with (out, in) weights)
    pooled = jnp.mean(x, axis=(2, 3))                  # (b, c)
    h = pooled @ w1.T                                  # Linear(dim -> hidden), bias-free
    h = h * jax.nn.sigmoid(h)                          # SiLU
    g = jax.nn.sigmoid(h @ w2.T)                       # Linear(hidden -> dim), Sigmoid
    return x * g[:, :, None, None]


if __name__ == "__main__":
    # batch=2, dim(channels)=32, spatial=16x16, hidden=int(32*0.25)=8
    b, c, hgt, wid = 2, 32, 16, 16
    hidden = int(c * 0.25)

    key = jax.random.PRNGKey(0)
    kx, k1, k2 = jax.random.split(key, 3)
    x = jax.random.normal(kx, (b, c, hgt, wid), dtype=jnp.float32)
    # PyTorch nn.Linear weight layout: (out_features, in_features), bias-free.
    w1 = jax.random.normal(k1, (hidden, c), dtype=jnp.float32) * (c ** -0.5)
    w2 = jax.random.normal(k2, (c, hidden), dtype=jnp.float32) * (hidden ** -0.5)

    out = squeeze_excitation(x, w1, w2)
    out = jax.block_until_ready(out)

    ref = reference(x, w1, w2)
    assert out.shape == (b, c, hgt, wid)
    np.testing.assert_allclose(np.asarray(out), np.asarray(ref), rtol=1e-5, atol=1e-5)
    print("KERNEL_OK")
</pallas_src>

<mosaic_0001>
module attributes {stable_mosaic.version = 11 : i64} {
  func.func @se_kernel(%arg0: i32, %arg1: memref<1x32x256xf32, #tpu.memory_space<vmem>>, %arg2: memref<8x32xf32, #tpu.memory_space<vmem>>, %arg3: memref<32x8xf32, #tpu.memory_space<vmem>>, %arg4: memref<1x32x256xf32, #tpu.memory_space<vmem>>) attributes {dimension_semantics = [#tpu.dimension_semantics<parallel>], iteration_bounds = array<i64: 2>, scalar_prefetch = 0 : i64, scratch_operands = 0 : i64, tpu.core_type = #tpu.core_type<tc>, window_params = [{transform_indices = @transform_0, window_bounds = array<i64: 1, 32, 256>}, {pipeline_mode = #tpu.pipeline_mode<synchronous>, transform_indices = @transform_1, window_bounds = array<i64: 8, 32>}, {pipeline_mode = #tpu.pipeline_mode<synchronous>, transform_indices = @transform_2, window_bounds = array<i64: 32, 8>}, {transform_indices = @transform_3, window_bounds = array<i64: 1, 32, 256>}]} {
    %c0 = arith.constant 0 : index
    %c0_0 = arith.constant 0 : index
    %c0_1 = arith.constant 0 : index
    %0 = vector.load %arg1[%c0, %c0_0, %c0_1] : memref<1x32x256xf32, #tpu.memory_space<vmem>>, vector<1x32x256xf32>
    %1 = vector.shape_cast %0 : vector<1x32x256xf32> to vector<32x256xf32>
    %cst = arith.constant 3.906250e-03 : f32
    %2 = vector.broadcast %cst : f32 to vector<256x1xf32>
    %cst_2 = arith.constant dense<0.000000e+00> : vector<32x1xf32>
    %3 = tpu.matmul %1, %2, %cst_2 {dimension_numbers = #tpu.dot_dimension_numbers<[1], [0], [0], [1], [0, 0, 1, 1], [], []>} : vector<32x256xf32>, vector<256x1xf32>, vector<32x1xf32> -> vector<32x1xf32>
    %c0_3 = arith.constant 0 : index
    %c0_4 = arith.constant 0 : index
    %4 = vector.load %arg2[%c0_3, %c0_4] : memref<8x32xf32, #tpu.memory_space<vmem>>, vector<8x32xf32>
    %cst_5 = arith.constant dense<0.000000e+00> : vector<8x1xf32>
    %5 = tpu.matmul %4, %3, %cst_5 {dimension_numbers = #tpu.dot_dimension_numbers<[1], [0], [0], [1], [0, 0, 1, 1], [], []>} : vector<8x32xf32>, vector<32x1xf32>, vector<8x1xf32> -> vector<8x1xf32>
    %6 = arith.negf %5 : vector<8x1xf32>
    %7 = math.exp %6 : vector<8x1xf32>
    %cst_6 = arith.constant 1.000000e+00 : f32
    %8 = vector.broadcast %cst_6 : f32 to vector<8x1xf32>
    %9 = arith.addf %8, %7 : vector<8x1xf32>
    %10 = arith.divf %8, %9 : vector<8x1xf32>
    %11 = arith.mulf %5, %10 : vector<8x1xf32>
    %c0_7 = arith.constant 0 : index
    %c0_8 = arith.constant 0 : index
    %12 = vector.load %arg3[%c0_7, %c0_8] : memref<32x8xf32, #tpu.memory_space<vmem>>, vector<32x8xf32>
    %cst_9 = arith.constant dense<0.000000e+00> : vector<32x1xf32>
    %13 = tpu.matmul %12, %11, %cst_9 {dimension_numbers = #tpu.dot_dimension_numbers<[1], [0], [0], [1], [0, 0, 1, 1], [], []>} : vector<32x8xf32>, vector<8x1xf32>, vector<32x1xf32> -> vector<32x1xf32>
    %14 = arith.negf %13 : vector<32x1xf32>
    %15 = math.exp %14 : vector<32x1xf32>
    %cst_10 = arith.constant 1.000000e+00 : f32
    %16 = vector.broadcast %cst_10 : f32 to vector<32x1xf32>
    %17 = arith.addf %16, %15 : vector<32x1xf32>
    %18 = arith.divf %16, %17 : vector<32x1xf32>
    %19 = vector.broadcast %18 : vector<32x1xf32> to vector<32x256xf32>
    %20 = arith.mulf %1, %19 : vector<32x256xf32>
    %c0_11 = arith.constant 0 : index
    %c0_12 = arith.constant 0 : index
    %c0_13 = arith.constant 0 : index
    %21 = vector.load %arg4[%c0_11, %c0_12, %c0_13] : memref<1x32x256xf32, #tpu.memory_space<vmem>>, vector<1x32x256xf32>
    %22 = vector.shape_cast %21 : vector<1x32x256xf32> to vector<32x256xf32>
    %23 = vector.shape_cast %20 : vector<32x256xf32> to vector<1x32x256xf32>
    tpu.vector_store %arg4[%c0_11, %c0_12, %c0_13], %23 {strides = array<i32>} : memref<1x32x256xf32, #tpu.memory_space<vmem>>, vector<1x32x256xf32>,
    return
  }
  func.func @transform_0(%arg0: i32) -> (i32, i32, i32) {
    %c0_i32 = arith.constant 0 : i32
    %c0_i32_0 = arith.constant 0 : i32
    %c0_i32_1 = arith.constant 0 : i32
    return %arg0, %c0_i32, %c0_i32_0 : i32, i32, i32
  }
  func.func @transform_1(%arg0: i32) -> (i32, i32) {
    %c0_i32 = arith.constant 0 : i32
    %c0_i32_0 = arith.constant 0 : i32
    %c0_i32_1 = arith.constant 0 : i32
    return %c0_i32, %c0_i32_0 : i32, i32
  }
  func.func @transform_2(%arg0: i32) -> (i32, i32) {
    %c0_i32 = arith.constant 0 : i32
    %c0_i32_0 = arith.constant 0 : i32
    %c0_i32_1 = arith.constant 0 : i32
    return %c0_i32, %c0_i32_0 : i32, i32
  }
  func.func @transform_3(%arg0: i32) -> (i32, i32, i32) {
    %c0_i32 = arith.constant 0 : i32
    %c0_i32_0 = arith.constant 0 : i32
    %c0_i32_1 = arith.constant 0 : i32
    return %arg0, %c0_i32, %c0_i32_0 : i32, i32, i32
  }
}

</mosaic_0001>

<llo_original>
// kernel: tpu_custom_call.1
$region0: #{tpu_custom_call.1}
  #allocation0 [shape = 'u32[]', space=smem, size = 0x4, offset = 0x4, fixed_abs, tag = 'smem constant byte address 0x4 - core index']
  #allocation1 [shape = 'u32[144,128]{1,0:T(1,128)}', space=vmem, size = 0x12000, scoped, tag = 'internal scratch']
  %s0 = inlined_call_operand.hbm [shape: f32[2,32,256], index: 0, kind: input, shape index: {}, may-alias: {0,3}]
  %s1 = inlined_call_operand.vmem [shape: f32[8,32], index: 1, kind: input, shape index: {}]
  %s2 = inlined_call_operand.vmem [shape: f32[32,8], index: 2, kind: input, shape index: {}]
  %s3 = inlined_call_operand.hbm [shape: f32[2,32,256], index: 3, kind: output, shape index: {}, may-alias: {0,3}]
  %s4 = sld [smem:[#allocation0]]
  $region49: #{tpu_custom_call.1} parent=0
    _
  %s6 = ssub.s32 1, %s4
  %s7 = scalar_select 0, %s6, %s4
  $region1: #{tpu_custom_call.1} parent=0
    #allocation2 [shape = 'u8[65536]{0}', space=vmem, size = 0x10000, scoped, tag = 'input window, operand 0']
    #allocation3 [shape = 's32[2]{0}', space=sflag, size = 0x8, scoped, tag = 'scoped memory for tpu_custom_call.1']
    #allocation4 [shape = 's32[2]{0}', space=sflag, size = 0x8, scoped, tag = 'scoped memory for tpu_custom_call.1']
    #allocation5 [shape = 'u8[65536]{0}', space=vmem, size = 0x10000, scoped, tag = 'output window, operand 0']
    %8 = vsyncpa [#allocation3], 0
    %s9 = scalar_lea.sflag [#allocation3], 1
    %10 = vsyncpa %s9, 0
    %11 = vsyncpa [#allocation4], 0
    %s12 = scalar_lea.sflag [#allocation4], 1
    %13 = vsyncpa %s12, 0
    loop: start=0, step=1, limit=4
    $region2: #{tpu_custom_call.1} parent=1 // loop_pre_header
      _
    $region3: #{tpu_custom_call.1} parent=1 // loop_header
      %s15 = sphi 0, %s19
      %p16 = scmp.ge.s32.totalorder %s15, 4
      %s25 = sphi 0, %s27
      %s28 = sphi 0, %s25
      %s29 = sphi 0, %s28
      %s45 = sphi 0, %s29
      %s49 = sphi 0, %s49
      %s51 = sphi 0, %s49
      %s52 = sphi 0, %s51
      %s66 = sphi 0, %s52
      %s70 = sphi 0, %s70
      %s72 = sphi 0, %s70
      %s73 = sphi 0, %s72
      %s87 = sphi 0, %s73
      %s93 = sphi 0, %s95
      %s96 = sphi 0, %s93
      %s97 = sphi 0, %s96
      %s113 = sphi 0, %s97
    $region4: #{tpu_custom_call.1} parent=1 // loop_header_branch
      %18 = sbr.rel (%p16) target = $region8
    $region5: #{tpu_custom_call.1} parent=1 // loop_body
      %s20 = ssub.s32 %s15, 1
      %s21 = ssub.s32 %s15, 2
      %s22 = sadd.s32 %s15, 1
      %s23 = ssub.s32 %s15, %s22
      %p24 = scmp.eq.s32.totalorder %s23, 0
      %s26 = sadd.s32 %s25, 1
      %s27 = scalar_select %p24, %s25, %s26
      %p30 = pneg %p24
      %p31 = scmp.eq.s32.totalorder %s15, 1
      %p32 = por %p30, %p31
      %p33 = scmp.ne.s32.totalorder %s25, %s28
      %p34 = scmp.eq.s32.totalorder %s15, 0
      %p35 = por %p33, %p34
      %p36 = scmp.ne.s32.totalorder %s25, %s28
      %p37 = scmp.eq.s32.totalorder %s20, 1
      %p38 = por %p36, %p37
      %p39 = scmp.ne.s32.totalorder %s28, %s29
      %p40 = scmp.eq.s32.totalorder %s20, 0
      %p41 = por %p39, %p40
      %p42 = scmp.ne.s32.totalorder %s28, %s29
      %p43 = scmp.eq.s32.totalorder %s21, 1
      %p44 = por %p42, %p43
      %p46 = scmp.ne.s32.totalorder %s29, %s45
      %p47 = scmp.eq.s32.totalorder %s21, 0
      %p48 = por %p46, %p47
      %s50 = sadd.s32 %s49, 1
      %p53 = scmp.eq.s32.totalorder %s15, 1
      %p54 = scmp.ne.s32.totalorder %s49, %s51
      %p55 = scmp.eq.s32.totalorder %s15, 0
      %p56 = por %p54, %p55
      %p57 = scmp.ne.s32.totalorder %s49, %s51
      %p58 = scmp.eq.s32.totalorder %s20, 1
      %p59 = por %p57, %p58
      %p60 = scmp.ne.s32.totalorder %s51, %s52
      %p61 = scmp.eq.s32.totalorder %s20, 0
      %p62 = por %p60, %p61
      %p63 = scmp.ne.s32.totalorder %s51, %s52
      %p64 = scmp.eq.s32.totalorder %s21, 1
      %p65 = por %p63, %p64
      %p67 = scmp.ne.s32.totalorder %s52, %s66
      %p68 = scmp.eq.s32.totalorder %s21, 0
      %p69 = por %p67, %p68
      %s71 = sadd.s32 %s70, 1
      %p74 = scmp.eq.s32.totalorder %s15, 1
      %p75 = scmp.ne.s32.totalorder %s70, %s72
      %p76 = scmp.eq.s32.totalorder %s15, 0
      %p77 = por %p75, %p76
      %p78 = scmp.ne.s32.totalorder %s70, %s72
      %p79 = scmp.eq.s32.totalorder %s20, 1
      %p80 = por %p78, %p79
      %p81 = scmp.ne.s32.totalorder %s72, %s73
      %p82 = scmp.eq.s32.totalorder %s20, 0
      %p83 = por %p81, %p82
      %p84 = scmp.ne.s32.totalorder %s72, %s73
      %p85 = scmp.eq.s32.totalorder %s21, 1
      %p86 = por %p84, %p85
      %p88 = scmp.ne.s32.totalorder %s73, %s87
      %p89 = scmp.eq.s32.totalorder %s21, 0
      %p90 = por %p88, %p89
      %s91 = ssub.s32 %s15, %s22
      %p92 = scmp.eq.s32.totalorder %s91, 0
      %s94 = sadd.s32 %s93, 1
      %s95 = scalar_select %p92, %s93, %s94
      %p98 = pneg %p92
      %p99 = scmp.eq.s32.totalorder %s15, 1
      %p100 = por %p98, %p99
      %p101 = scmp.ne.s32.totalorder %s93, %s96
      %p102 = scmp.eq.s32.totalorder %s15, 0
      %p103 = por %p101, %p102
      %p104 = scmp.ne.s32.totalorder %s93, %s96
      %p105 = scmp.eq.s32.totalorder %s20, 1
      %p106 = por %p104, %p105
      %p107 = scmp.ne.s32.totalorder %s96, %s97
      %p108 = scmp.eq.s32.totalorder %s20, 0
      %p109 = por %p107, %p108
      %p110 = scmp.ne.s32.totalorder %s96, %s97
      %p111 = scmp.eq.s32.totalorder %s21, 1
      %p112 = por %p110, %p111
      %p114 = scmp.ne.s32.totalorder %s97, %s113
      %p115 = scmp.eq.s32.totalorder %s21, 0
      %p116 = por %p114, %p115
      %p117 = scmp.le.s32.totalorder 1, %s15
      %p118 = scmp.lt.s32.totalorder %s15, 3
      %p119 = pnand %p117, %p118
      %p120 = pneg %p119
      // Predicated region
      $region9: #{tpu_custom_call.1} parent=5 // pred_check
        _
      $region10: #{tpu_custom_call.1} parent=5 // pred_check_branch
        %122 = sbr.rel (%p119) target = $region12
      $region11: #{tpu_custom_call.1} parent=5 // pred_region
        %s123 = ssub.s32 %s15, 1
        // Predicated region
        $region13: #{tpu_custom_call.1} parent=11 // pred_check
          %p124 = pneg %p62
        $region14: #{tpu_custom_call.1} parent=11 // pred_check_branch
          %126 = sbr.rel (%p124) target = $region16
        $region15: #{tpu_custom_call.1} parent=11 // pred_region
          _
        $region16: #{tpu_custom_call.1} parent=11 // pred_fallthru
          _
        // Predicated region
        $region17: #{tpu_custom_call.1} parent=11 // pred_check
          %p127 = pneg %p83
        $region18: #{tpu_custom_call.1} parent=11 // pred_check_branch
          %129 = sbr.rel (%p127) target = $region20
        $region19: #{tpu_custom_call.1} parent=11 // pred_region
          _
        $region20: #{tpu_custom_call.1} parent=11 // pred_fallthru
          _
      $region12: #{tpu_custom_call.1} parent=5 // pred_fallthru
        _
      %p130 = scmp.lt.s32.totalorder %s15, 2
      // Predicated region
      $region21: #{tpu_custom_call.1} parent=5 // pred_check
        %p131 = pneg %p130
      $region22: #{tpu_custom_call.1} parent=5 // pred_check_branch
        %133 = sbr.rel (%p131) target = $region24
      $region23: #{tpu_custom_call.1} parent=5 // pred_region
        // Predicated region
        $region25: #{tpu_custom_call.1} parent=23 // pred_check
          %p134 = pneg %p35
        $region26: #{tpu_custom_call.1} parent=23 // pred_check_branch
          %136 = sbr.rel (%p134) target = $region28
        $region27: #{tpu_custom_call.1} parent=23 // pred_region
          %s137 = sand.u32 %s25, 1
          %s138 = scalar_lea.sflag [#allocation3], %s137
          %s139 = sand.u32 %s25, 1
          %s140 = smul.addr %s139, 64
          %s141 = scalar_lea.vmem [#allocation2], %s140
          %s143 = ssub.s32 1024, 1024
          %144 = vsyncadd %s138, %s143
          %s145 = smul.addr %s15, 8
          %s146 = smul.addr %s145, 128
          %s147 = scalar_lea.hbm %s0, %s146
          %s148 = sshll.u32 %s141, 4
          %s149 = int_to_ptr.vmem [resolvable:$true] %s148
          %154 = dma.hbm_to_vmem [thread:$0]  %s147, 1024, %s149, %s138, 256, 256, 16
        $region28: #{tpu_custom_call.1} parent=23 // pred_fallthru
          _
      $region24: #{tpu_custom_call.1} parent=5 // pred_fallthru
        _
      %p155 = scmp.le.s32.totalorder 1, %s15
      %p156 = scmp.lt.s32.totalorder %s15, 3
      %p157 = pnand %p155, %p156
      %p158 = pneg %p157
      // Predicated region
      $region29: #{tpu_custom_call.1} parent=5 // pred_check
        _
      $region30: #{tpu_custom_call.1} parent=5 // pred_check_branch
        %160 = sbr.rel (%p157) target = $region32
      $region31: #{tpu_custom_call.1} parent=5 // pred_region
        %s161 = ssub.s32 %s15, 1
        %s162 = sand.u32 %s28, 1
        %s163 = scalar_lea.sflag [#allocation3], %s162
        %s164 = sand.u32 %s28, 1
        %s165 = smul.addr %s164, 64
        %s166 = scalar_lea.vmem [#allocation2], %s165
        // Predicated region
        $region33: #{tpu_custom_call.1} parent=31 // pred_check
          %p167 = pneg %p41
        $region34: #{tpu_custom_call.1} parent=31 // pred_check_branch
          %169 = sbr.rel (%p167) target = $region36
        $region35: #{tpu_custom_call.1} parent=31 // pred_region
          %170 = dma.done %s163, 1024
        $region36: #{tpu_custom_call.1} parent=31 // pred_fallthru
          _
        %s171 = sand.u32 %s28, 1
        %s172 = scalar_lea.sflag [#allocation3], %s171
        %s173 = sand.u32 %s28, 1
        %s174 = smul.addr %s173, 64
        %s175 = scalar_lea.vmem [#allocation2], %s174
        %p176 = pneg %p41
        %p177 = pneg %p38
        %p178 = pneg %p62
        %p179 = pneg %p59
        %p180 = pneg %p83
        %p181 = pneg %p80
        %p182 = pneg %p109
        %p183 = pneg %p106
        %s184 = sand.u32 %s96, 1
        %s185 = scalar_lea.sflag [#allocation4], %s184
        %s186 = sand.u32 %s96, 1
        %s187 = smul.addr %s186, 64
        %s188 = scalar_lea.vmem [#allocation5], %s187
        %v189 = vld [vmem:[%s166] sm:$0xff]
        %v190 = vld [vmem:[%s166 + $0x8] sm:$0xff]
        %v191 = vld [vmem:[%s166 + $0x10] sm:$0xff]
        %v192 = vld [vmem:[%s166 + $0x18] sm:$0xff]
        %v193 = vld [vmem:[%s166 + $0x20] sm:$0xff]
        %v194 = vld [vmem:[%s166 + $0x28] sm:$0xff]
        %v195 = vld [vmem:[%s166 + $0x30] sm:$0xff]
        %v196 = vld [vmem:[%s166 + $0x38] sm:$0xff]
        %197 = vmatprep.subr.mxu0 0.0
        %198 = vmatpush1.msra.mxu0 0.00390625
        %199 = vmatprep.subr.mxu0 0.0
        %200 = vmatpush1.msra.mxu0 0.00390625
        %201 = vmatprep.subr.mxu0 0.0
        %202 = vmatpush1.msra.mxu0 0.00390625
        %203 = vmatprep.subr.mxu0 0.0
        %204 = vmatpush1.msra.mxu0 0.00390625
        %205 = vmatprep.subr.mxu0 0.0
        %206 = vmatpush1.msra.mxu0 0.00390625
        %207 = vmatprep.subr.mxu0 0.0
        %208 = vmatpush1.msra.mxu0 0.00390625
        %209 = vmatprep.subr.mxu0 0.0
        %210 = vmatpush1.msra.mxu0 0.00390625
        %211 = vmatprep.subr.mxu0 0.0
        %212 = vmatpush1.msra.mxu0 0.00390625
        %213 = vmatprep.subr.mxu0 0.0
        %214 = vmatpush1.msra.mxu0 0.00390625
        %215 = vmatprep.subr.mxu0 0.0
        %216 = vmatpush1.msra.mxu0 0.00390625
        %217 = vmatprep.subr.mxu0 0.0
        %218 = vmatpush1.msra.mxu0 0.00390625
        %219 = vmatprep.subr.mxu0 0.0
        %220 = vmatpush1.msra.mxu0 0.00390625
        %221 = vmatprep.subr.mxu0 0.0
        %222 = vmatpush1.msra.mxu0 0.00390625
        %223 = vmatprep.subr.mxu0 0.0
        %224 = vmatpush1.msra.mxu0 0.00390625
        %225 = vmatprep.subr.mxu0 0.0
        %226 = vmatpush1.msra.mxu0 0.00390625
        %227 = vmatprep.subr.mxu0 0.0
        %228 = vmatpush1.msra.mxu0 0.00390625
        %229 = vmatprep.subr.mxu0 0.0
        %230 = vmatpush1.msra.mxu0 0.00390625
        %231 = vmatprep.subr.mxu0 0.0
        %232 = vmatpush1.msra.mxu0 0.00390625
        %233 = vmatprep.subr.mxu0 0.0
        %234 = vmatpush1.msra.mxu0 0.00390625
        %235 = vmatprep.subr.mxu0 0.0
        %236 = vmatpush1.msra.mxu0 0.00390625
        %237 = vmatprep.subr.mxu0 0.0
        %238 = vmatpush1.msra.mxu0 0.00390625
        %239 = vmatprep.subr.mxu0 0.0
        %240 = vmatpush1.msra.mxu0 0.00390625
        %241 = vmatprep.subr.mxu0 0.0
        %242 = vmatpush1.msra.mxu0 0.00390625
        %243 = vmatprep.subr.mxu0 0.0
        %244 = vmatpush1.msra.mxu0 0.00390625
        %245 = vmatprep.subr.mxu0 0.0
        %246 = vmatpush1.msra.mxu0 0.00390625
        %247 = vmatprep.subr.mxu0 0.0
        %248 = vmatpush1.msra.mxu0 0.00390625
        %249 = vmatprep.subr.mxu0 0.0
        %250 = vmatpush1.msra.mxu0 0.00390625
        %251 = vmatprep.subr.mxu0 0.0
        %252 = vmatpush1.msra.mxu0 0.00390625
        %253 = vmatprep.subr.mxu0 0.0
        %254 = vmatpush1.msra.mxu0 0.00390625
        %255 = vmatprep.subr.mxu0 0.0
        %256 = vmatpush1.msra.mxu0 0.00390625
        %257 = vmatprep.subr.mxu0 0.0
        %258 = vmatpush1.msra.mxu0 0.00390625
        %259 = vmatprep.subr.mxu0 0.0
        %260 = vmatpush1.msra.mxu0 0.00390625
        %261 = vmatprep.mubr.f32.mxu0 %v190
        %262 = vmatmul.mubr.f32.gmra.mrb[0].mxu0 %v189
        %v263 = vpop.f32.mrb[0].mxu0
        %v264 = vadd.f32 0.0, %v263
        %v265 = vpop.f32.mrb[0].mxu0
        %266 = vmatprep.mubr.f32.mxu0 %v192
        %267 = vmatmul.mubr.f32.gmra.mrb[0].mxu0 %v191
        %v268 = vpop.f32.mrb[0].mxu0
        %v269 = vadd.f32 0.0, %v268
        %v270 = vpop.f32.mrb[0].mxu0
        %271 = vmatprep.mubr.f32.mxu0 %v194
        %272 = vmatmul.mubr.f32.gmra.mrb[0].mxu0 %v193
        %v273 = vpop.f32.mrb[0].mxu0
        %v274 = vadd.f32 0.0, %v273
        %v275 = vpop.f32.mrb[0].mxu0
        %276 = vmatprep.mubr.f32.mxu0 %v196
        %277 = vmatmul.mubr.f32.gmra.mrb[0].mxu0 %v195
        %v278 = vpop.f32.mrb[0].mxu0
        %v279 = vadd.f32 0.0, %v278
        %v280 = vpop.f32.mrb[0].mxu0
        %281 = vdwg.mxu0
        %v282 = vld [vmem:[%s1] sm:$0xff]
        %vm283 = vcmask 261120
        %v285 = vsel %vm283, %v282, 0
        %287 = vmatprep.subr.mxu0 0.0
        %288 = vmatpush1.msra.mxu0 %v264
        %289 = vmatprep.subr.mxu0 0.0
        %290 = vmatpush1.msra.mxu0 %v269
        %291 = vmatprep.subr.mxu0 0.0
        %292 = vmatpush1.msra.mxu0 %v274
        %293 = vmatprep.subr.mxu0 0.0
        %294 = vmatpush1.msra.mxu0 %v279
        %295 = vmatprep.subr.mxu0 0.0
        %296 = vmatpush1.msra.mxu0 0.0
        %297 = vmatprep.subr.mxu0 0.0
        %298 = vmatpush1.msra.mxu0 0.0
        %299 = vmatprep.subr.mxu0 0.0
        %300 = vmatpush1.msra.mxu0 0.0
        %301 = vmatprep.subr.mxu0 0.0
        %302 = vmatpush1.msra.mxu0 0.0
        %303 = vmatprep.subr.mxu0 0.0
        %304 = vmatpush1.msra.mxu0 0.0
        %305 = vmatprep.subr.mxu0 0.0
        %306 = vmatpush1.msra.mxu0 0.0
        %307 = vmatprep.subr.mxu0 0.0
        %308 = vmatpush1.msra.mxu0 0.0
        %309 = vmatprep.subr.mxu0 0.0
        %310 = vmatpush1.msra.mxu0 0.0
        %311 = vmatprep.subr.mxu0 0.0
        %312 = vmatpush1.msra.mxu0 0.0
        %313 = vmatprep.subr.mxu0 0.0
        %314 = vmatpush1.msra.mxu0 0.0
        %315 = vmatprep.subr.mxu0 0.0
        %316 = vmatpush1.msra.mxu0 0.0
        %317 = vmatprep.subr.mxu0 0.0
        %318 = vmatpush1.msra.mxu0 0.0
        %319 = vmatprep.subr.mxu0 0.0
        %320 = vmatpush1.msra.mxu0 0.0
        %321 = vmatprep.subr.mxu0 0.0
        %322 = vmatpush1.msra.mxu0 0.0
        %323 = vmatprep.subr.mxu0 0.0
        %324 = vmatpush1.msra.mxu0 0.0
        %325 = vmatprep.subr.mxu0 0.0
        %326 = vmatpush1.msra.mxu0 0.0
        %327 = vmatprep.subr.mxu0 0.0
        %328 = vmatpush1.msra.mxu0 0.0
        %329 = vmatprep.subr.mxu0 0.0
        %330 = vmatpush1.msra.mxu0 0.0
        %331 = vmatprep.subr.mxu0 0.0
        %332 = vmatpush1.msra.mxu0 0.0
        %333 = vmatprep.subr.mxu0 0.0
        %334 = vmatpush1.msra.mxu0 0.0
        %335 = vmatprep.subr.mxu0 0.0
        %336 = vmatpush1.msra.mxu0 0.0
        %337 = vmatprep.subr.mxu0 0.0
        %338 = vmatpush1.msra.mxu0 0.0
        %339 = vmatprep.subr.mxu0 0.0
        %340 = vmatpush1.msra.mxu0 0.0
        %341 = vmatprep.subr.mxu0 0.0
        %342 = vmatpush1.msra.mxu0 0.0
        %343 = vmatprep.subr.mxu0 0.0
        %344 = vmatpush1.msra.mxu0 0.0
        %345 = vmatprep.subr.mxu0 0.0
        %346 = vmatpush1.msra.mxu0 0.0
        %347 = vmatprep.subr.mxu0 0.0
        %348 = vmatpush1.msra.mxu0 0.0
        %349 = vmatprep.subr.mxu0 0.0
        %350 = vmatpush1.msra.mxu0 0.0
        %351 = vmatprep.mubr.f32.mxu0 0.0
        %352 = vmatmul.mubr.f32.gmra.mrb[0].mxu0 %v285
        %v353 = vpop.f32.mrb[0].mxu0
        %v354 = vadd.f32 0.0, %v353
        %v355 = vpop.f32.mrb[0].mxu0
        %356 = vdwg.mxu0
        %v357 = vxor.u32 %v354, 2147483648
        %v358 = vmul.f32 %v357, 1.442695
        %v359 = vpow.pop %v358
        %v360 = vadd.f32 %v359, 1.0
        %v361 = vrcp.pop %v360
        %v362 = vmul.f32 1.0, %v361
        %v363 = vmul.f32 %v354, %v362
        %v364 = vld [vmem:[%s2] sm:$0xff]
        %v365 = vld [vmem:[%s2 + $0x8] sm:$0xff]
        %v366 = vld [vmem:[%s2 + $0x10] sm:$0xff]
        %v367 = vld [vmem:[%s2 + $0x18] sm:$0xff]
        %vm368 = vcmask 64512
        %v370 = vsel %vm368, %v364, 0
        %v373 = vsel %vm368, %v365, 0
        %v376 = vsel %vm368, %v366, 0
        %v379 = vsel %vm368, %v367, 0
        %381 = vmatprep.subr.mxu0 0.0
        %382 = vmatpush1.msra.mxu0 %v363
        %383 = vmatprep.subr.mxu0 0.0
        %384 = vmatpush1.msra.mxu0 0.0
        %385 = vmatprep.subr.mxu0 0.0
        %386 = vmatpush1.msra.mxu0 0.0
        %387 = vmatprep.subr.mxu0 0.0
        %388 = vmatpush1.msra.mxu0 0.0
        %389 = vmatprep.subr.mxu0 0.0
        %390 = vmatpush1.msra.mxu0 0.0
        %391 = vmatprep.subr.mxu0 0.0
        %392 = vmatpush1.msra.mxu0 0.0
        %393 = vmatprep.subr.mxu0 0.0
        %394 = vmatpush1.msra.mxu0 0.0
        %395 = vmatprep.subr.mxu0 0.0
        %396 = vmatpush1.msra.mxu0 0.0
        %397 = vmatprep.subr.mxu0 0.0
        %398 = vmatpush1.msra.mxu0 0.0
        %399 = vmatprep.subr.mxu0 0.0
        %400 = vmatpush1.msra.mxu0 0.0
        %401 = vmatprep.subr.mxu0 0.0
        %402 = vmatpush1.msra.mxu0 0.0
        %403 = vmatprep.subr.mxu0 0.0
        %404 = vmatpush1.msra.mxu0 0.0
        %405 = vmatprep.subr.mxu0 0.0
        %406 = vmatpush1.msra.mxu0 0.0
        %407 = vmatprep.subr.mxu0 0.0
        %408 = vmatpush1.msra.mxu0 0.0
        %409 = vmatprep.subr.mxu0 0.0
        %410 = vmatpush1.msra.mxu0 0.0
        %411 = vmatprep.subr.mxu0 0.0
        %412 = vmatpush1.msra.mxu0 0.0
        %413 = vmatprep.subr.mxu0 0.0
        %414 = vmatpush1.msra.mxu0 0.0
        %415 = vmatprep.subr.mxu0 0.0
        %416 = vmatpush1.msra.mxu0 0.0
        %417 = vmatprep.subr.mxu0 0.0
        %418 = vmatpush1.msra.mxu0 0.0
        %419 = vmatprep.subr.mxu0 0.0
        %420 = vmatpush1.msra.mxu0 0.0
        %421 = vmatprep.subr.mxu0 0.0
        %422 = vmatpush1.msra.mxu0 0.0
        %423 = vmatprep.subr.mxu0 0.0
        %424 = vmatpush1.msra.mxu0 0.0
        %425 = vmatprep.subr.mxu0 0.0
        %426 = vmatpush1.msra.mxu0 0.0
        %427 = vmatprep.subr.mxu0 0.0
        %428 = vmatpush1.msra.mxu0 0.0
        %429 = vmatprep.subr.mxu0 0.0
        %430 = vmatpush1.msra.mxu0 0.0
        %431 = vmatprep.subr.mxu0 0.0
        %432 = vmatpush1.msra.mxu0 0.0
        %433 = vmatprep.subr.mxu0 0.0
        %434 = vmatpush1.msra.mxu0 0.0
        %435 = vmatprep.subr.mxu0 0.0
        %436 = vmatpush1.msra.mxu0 0.0
        %437 = vmatprep.subr.mxu0 0.0
        %438 = vmatpush1.msra.mxu0 0.0
        %439 = vmatprep.subr.mxu0 0.0
        %440 = vmatpush1.msra.mxu0 0.0
        %441 = vmatprep.subr.mxu0 0.0
        %442 = vmatpush1.msra.mxu0 0.0
        %443 = vmatprep.subr.mxu0 0.0
        %444 = vmatpush1.msra.mxu0 0.0
        %445 = vmatprep.mubr.f32.mxu0 0.0
        %446 = vmatmul.mubr.f32.gmra.mrb[0].mxu0 %v370
        %v447 = vpop.f32.mrb[0].mxu0
        %v448 = vadd.f32 0.0, %v447
        %v449 = vpop.f32.mrb[0].mxu0
        %450 = vmatprep.mubr.f32.mxu0 0.0
        %451 = vmatmul.mubr.f32.gmra.mrb[0].mxu0 %v373
        %v452 = vpop.f32.mrb[0].mxu0
        %v453 = vadd.f32 0.0, %v452
        %v454 = vpop.f32.mrb[0].mxu0
        %455 = vmatprep.mubr.f32.mxu0 0.0
        %456 = vmatmul.mubr.f32.gmra.mrb[0].mxu0 %v376
        %v457 = vpop.f32.mrb[0].mxu0
        %v458 = vadd.f32 0.0, %v457
        %v459 = vpop.f32.mrb[0].mxu0
        %460 = vmatprep.mubr.f32.mxu0 0.0
        %461 = vmatmul.mubr.f32.gmra.mrb[0].mxu0 %v379
        %v462 = vpop.f32.mrb[0].mxu0
        %v463 = vadd.f32 0.0, %v462
        %v464 = vpop.f32.mrb[0].mxu0
        %465 = vdwg.mxu0
        %v466 = vxor.u32 %v448, 2147483648
        %v467 = vxor.u32 %v453, 2147483648
        %v468 = vxor.u32 %v458, 2147483648
        %v469 = vxor.u32 %v463, 2147483648
        %v470 = vmul.f32 %v466, 1.442695
        %v471 = vpow.pop %v470
        %v472 = vmul.f32 %v467, 1.442695
        %v473 = vpow.pop %v472
        %v474 = vmul.f32 %v468, 1.442695
        %v475 = vpow.pop %v474
        %v476 = vmul.f32 %v469, 1.442695
        %v477 = vpow.pop %v476
        %v478 = vadd.f32 %v471, 1.0
        %v479 = vadd.f32 %v473, 1.0
        %v480 = vadd.f32 %v475, 1.0
        %v481 = vadd.f32 %v477, 1.0
        %v482 = vrcp.pop %v478
        %v483 = vmul.f32 1.0, %v482
        %v484 = vrcp.pop %v479
        %v485 = vmul.f32 1.0, %v484
        %v486 = vrcp.pop %v480
        %v487 = vmul.f32 1.0, %v486
        %v488 = vrcp.pop %v481
        %v489 = vmul.f32 1.0, %v488
        %491 = vset.pattern.permute.xlu0 0
        %492 = vperm.xlu0 %491, %v483
        %v493 = vpop.permute.xlu0 %492
        %496 = vset.pattern.permute.xlu0 0
        %497 = vperm.xlu0 %496, %v485
        %v498 = vpop.permute.xlu0 %497
        %501 = vset.pattern.permute.xlu0 0
        %502 = vperm.xlu0 %501, %v487
        %v503 = vpop.permute.xlu0 %502
        %506 = vset.pattern.permute.xlu0 0
        %507 = vperm.xlu0 %506, %v489
        %v508 = vpop.permute.xlu0 %507
        %v510 = vmul.f32 %v189, %v493
        %v511 = vmul.f32 %v190, %v493
        %v512 = vmul.f32 %v191, %v498
        %v513 = vmul.f32 %v192, %v498
        %v514 = vmul.f32 %v193, %v503
        %v515 = vmul.f32 %v194, %v503
        %v516 = vmul.f32 %v195, %v508
        %v517 = vmul.f32 %v196, %v508
        %518 = vst [vmem:[%s188] sm:$0xff] %v510
        %519 = vst [vmem:[%s188 + $0x8] sm:$0xff] %v511
        %520 = vst [vmem:[%s188 + $0x10] sm:$0xff] %v512
        %521 = vst [vmem:[%s188 + $0x18] sm:$0xff] %v513
        %522 = vst [vmem:[%s188 + $0x20] sm:$0xff] %v514
        %523 = vst [vmem:[%s188 + $0x28] sm:$0xff] %v515
        %524 = vst [vmem:[%s188 + $0x30] sm:$0xff] %v516
        %525 = vst [vmem:[%s188 + $0x38] sm:$0xff] %v517
        %s526 = sand.u32 %s96, 1
        %s527 = scalar_lea.sflag [#allocation4], %s526
        %s528 = sand.u32 %s96, 1
        %s529 = smul.addr %s528, 64
        %s530 = scalar_lea.vmem [#allocation5], %s529
        // Predicated region
        $region37: #{tpu_custom_call.1} parent=31 // pred_check
          %p531 = pneg %p106
        $region38: #{tpu_custom_call.1} parent=31 // pred_check_branch
          %533 = sbr.rel (%p531) target = $region40
        $region39: #{tpu_custom_call.1} parent=31 // pred_region
          %s535 = ssub.s32 1024, 1024
          %536 = vsyncadd %s527, %s535
          %s537 = smul.addr %s20, 8
          %s538 = smul.addr %s537, 128
          %s539 = scalar_lea.hbm %s3, %s538
          %s540 = sshll.u32 %s530, 4
          %s541 = int_to_ptr.vmem [resolvable:$true] %s540
          %546 = dma.vmem_to_hbm [thread:$0]  %s541, 1024, %s539, %s527, 256, 256, 16
        $region40: #{tpu_custom_call.1} parent=31 // pred_fallthru
          _
      $region32: #{tpu_custom_call.1} parent=5 // pred_fallthru
        _
      %p547 = scmp.le.s32.totalorder 2, %s15
      // Predicated region
      $region41: #{tpu_custom_call.1} parent=5 // pred_check
        %p548 = pneg %p547
      $region42: #{tpu_custom_call.1} parent=5 // pred_check_branch
        %550 = sbr.rel (%p548) target = $region44
      $region43: #{tpu_custom_call.1} parent=5 // pred_region
        %s551 = ssub.s32 %s15, 2
        // Predicated region
        $region45: #{tpu_custom_call.1} parent=43 // pred_check
          %p552 = pneg %p112
        $region46: #{tpu_custom_call.1} parent=43 // pred_check_branch
          %554 = sbr.rel (%p552) target = $region48
        $region47: #{tpu_custom_call.1} parent=43 // pred_region
          %s555 = sand.u32 %s97, 1
          %s556 = scalar_lea.sflag [#allocation4], %s555
          %s557 = sand.u32 %s97, 1
          %s558 = smul.addr %s557, 64
          %s559 = scalar_lea.vmem [#allocation5], %s558
          %560 = dma.done %s556, 1024
        $region48: #{tpu_custom_call.1} parent=43 // pred_fallthru
          _
      $region44: #{tpu_custom_call.1} parent=5 // pred_fallthru
        _
    $region6: #{tpu_custom_call.1} parent=1 // loop_footer
      %s19 = sadd.s32 1, %s15
    $region7: #{tpu_custom_call.1} parent=1 // loop_footer_branch
      %14 = sbr.rel target = $region3
    $region8: #{tpu_custom_call.1} parent=1 // loop_exit
      _
    %561 = vsyncpa [#allocation3], 1
    %s562 = scalar_lea.sflag [#allocation3], 1
    %563 = vsyncpa %s562, 1
    %564 = vsyncpa [#allocation4], 1
    %s565 = scalar_lea.sflag [#allocation4], 1
    %566 = vsyncpa %s565, 1

</llo_original>
